<compile_context>
chip_gen: v6e
topology: v6e:2x2x1
jax: 0.10.0
libtpu: 0.0.40
codegen_flags: <defaults>
</compile_context>

<pallas_src>
import numpy as np
import jax
import jax.numpy as jnp
from jax.experimental import pallas as pl
from jax.experimental.pallas import tpu as pltpu


# ----------------------------------------------------------------------------
# Generation-aware VMEM budget
# ----------------------------------------------------------------------------

def _vmem_config():
    try:
        cap = int(pltpu.get_tpu_info().vmem_capacity_bytes)
    except Exception:
        cap = 0
    if cap >= (100 << 20):          # 128 MiB parts (v5e / v6e): bigger budget, deeper pipeline
        return 96 << 20, True
    return 48 << 20, False          # v7x (64 MiB/TC) or unknown: conservative


_VMEM_LIMIT, _BIG_VMEM = _vmem_config()
_TM_MAX = 512


def _round_up(a, b):
    return -(-a // b) * b


def _pick_tile(dim, candidates):
    for c in candidates:
        if dim >= c and dim % c == 0:
            return c
    return dim  # full extent (allowed even if not 8/128-aligned)


def _block_spec(block_shape, index_map, *, buffered=False):
    """BlockSpec, optionally with 3-deep pipelining on large-VMEM generations."""
    if buffered and _BIG_VMEM and hasattr(pl, "Buffered"):
        try:
            return pl.BlockSpec(block_shape, index_map, pipeline_mode=pl.Buffered(3))
        except TypeError:           # older jax without pipeline_mode kwarg
            pass
    return pl.BlockSpec(block_shape, index_map)


# ----------------------------------------------------------------------------
# Fused tiled matmul kernel: y = relu?((x @ w) [* scale + bias])
# ----------------------------------------------------------------------------

def _make_matmul_kernel(apply_relu, has_affine, use_scratch):
    def kernel(*refs):
        x_ref, w_ref = refs[0], refs[1]
        idx = 2
        if has_affine:
            scale_ref, bias_ref = refs[2], refs[3]
            idx = 4
        o_ref = refs[idx]
        acc_ref = refs[idx + 1] if use_scratch else o_ref
        k = pl.program_id(2)

        @pl.when(k == 0)
        def _():
            acc_ref[...] = jnp.zeros_like(acc_ref)

        acc_ref[...] += jnp.dot(x_ref[...], w_ref[...],
                                preferred_element_type=jnp.float32)

        if use_scratch or has_affine or apply_relu:
            @pl.when(k == pl.num_programs(2) - 1)
            def _():
                y = acc_ref[...]
                if has_affine:
                    y = y * scale_ref[...] + bias_ref[...]
                if apply_relu:
                    y = jnp.maximum(y, 0.0)
                o_ref[...] = y.astype(o_ref.dtype)

    return kernel


def pallas_matmul(x, w, scale=None, bias=None, *, apply_relu=False,
                  out_dtype=jnp.float32, operand_dtype=jnp.bfloat16):
    """y = relu?((x @ w) * scale + bias);  x:(M,K)  w:(K,N)  scale,bias:(N,) or None.
    Accumulation is always f32; when out_dtype is narrower the accumulator lives in
    a VMEM scratch and is cast only in the last-K epilogue."""
    M, K = x.shape
    Kw, N = w.shape
    assert K == Kw, (K, Kw)
    has_affine = scale is not None
    use_scratch = (out_dtype != jnp.float32)

    tk = _pick_tile(K, (2048, 1024, 512, 256, 128))
    tn = _pick_tile(N, (2048, 1024, 512, 256, 128))
    if M <= _TM_MAX:
        tm, Mp = M, M
    else:
        tm = _pick_tile(M, (512, 256, 128))
        if tm == M:                     # nothing divides -> pad to a multiple of _TM_MAX
            tm = _TM_MAX
            Mp = _round_up(M, tm)
        else:
            Mp = M
    k_steps = K // tk
    buffered = k_steps >= 3

    xin = x.astype(operand_dtype)
    if Mp != M:
        xin = jnp.pad(xin, ((0, Mp - M), (0, 0)))
    win = w.astype(operand_dtype)

    in_specs = [
        _block_spec((tm, tk), lambda i, j, k: (i, k), buffered=buffered),
        _block_spec((tk, tn), lambda i, j, k: (k, j), buffered=buffered),
    ]
    args = [xin, win]
    if has_affine:
        in_specs += [
            pl.BlockSpec((1, tn), lambda i, j, k: (0, j)),
            pl.BlockSpec((1, tn), lambda i, j, k: (0, j)),
        ]
        args += [scale.reshape(1, N).astype(jnp.float32),
                 bias.reshape(1, N).astype(jnp.float32)]

    scratch = [pltpu.VMEM((tm, tn), jnp.float32)] if use_scratch else []

    out = pl.pallas_call(
        _make_matmul_kernel(apply_relu, has_affine, use_scratch),
        out_shape=jax.ShapeDtypeStruct((Mp, N), out_dtype),
        grid_spec=pltpu.PrefetchScalarGridSpec(
            num_scalar_prefetch=0,
            grid=(Mp // tm, N // tn, k_steps),
            in_specs=in_specs,
            out_specs=pl.BlockSpec((tm, tn), lambda i, j, k: (i, j)),
            scratch_shapes=scratch,
        ),
        compiler_params=pltpu.CompilerParams(
            dimension_semantics=("parallel", "parallel", "arbitrary"),
            vmem_limit_bytes=_VMEM_LIMIT),
    )(*args)
    if Mp != M:
        out = out[:M]
    return out


# ----------------------------------------------------------------------------
# Fused 3x3 "same" conv + BN + ReLU kernel (no im2col materialization)
# ----------------------------------------------------------------------------

def _make_conv3x3_kernel(W, apply_relu):
    def kernel(x_ref, w_ref, scale_ref, bias_ref, o_ref, acc_ref):
        # x_ref: (1, W+2, tk)  one padded input row (row tap selected by index_map)
        # w_ref: (1, 3, tk, tn)  the 3 column taps for this row tap / channel block
        r = pl.program_id(2)

        @pl.when(r == 0)
        def _():
            acc_ref[...] = jnp.zeros_like(acc_ref)

        acc = acc_ref[...]
        for dx in range(3):                                   # static unroll: column taps
            acc += jnp.dot(x_ref[0, dx:dx + W, :], w_ref[0, dx],
                           preferred_element_type=jnp.float32)
        acc_ref[...] = acc

        @pl.when(r == pl.num_programs(2) - 1)
        def _():
            y = acc_ref[...] * scale_ref[...] + bias_ref[...]
            if apply_relu:
                y = jnp.maximum(y, 0.0)
            o_ref[0] = y.astype(o_ref.dtype)

    return kernel


def pallas_conv3x3_bn_relu(x_nhwc, w, scale, bias, *, out_dtype=jnp.bfloat16):
    """3x3 conv (stride 1, pad 1, no bias) fused with folded BN + ReLU.
    x: (N, H, W, C);  w: (3, 3, C, Co) laid out [dy, dx, cin, cout].
    The row taps (dy) and input-channel blocks form the reduction grid axis (the
    dy shift is expressed in the x index_map on a spatially padded slab); the 3
    column taps are unrolled in-kernel with static slices. No im2col tensor is
    ever written to HBM."""
    N, H, W, C = x_nhwc.shape
    _, _, Cw, Co = w.shape
    assert Cw == C, (Cw, C)

    xp = jnp.pad(x_nhwc.astype(jnp.bfloat16), ((0, 0), (1, 1), (1, 1), (0, 0)))
    xp = xp.reshape(N * (H + 2), W + 2, C)               # rows of padded images

    tk = _pick_tile(C, (2048, 1024, 512, 256, 128))
    tn = _pick_tile(Co, (512, 256, 128))
    kt = C // tk                                          # channel blocks per row tap

    def x_map(m, j, r, H=H, kt=kt):
        # m indexes output row (n, h); dy = r // kt shifts into the padded slab.
        return ((m // H) * (H + 2) + (m % H) + r // kt, 0, r % kt)

    def w_map(m, j, r, kt=kt):
        return (r // kt, 0, r % kt, j)

    out = pl.pallas_call(
        _make_conv3x3_kernel(W, apply_relu=True),
        out_shape=jax.ShapeDtypeStruct((N * H, W, Co), out_dtype),
        grid_spec=pltpu.PrefetchScalarGridSpec(
            num_scalar_prefetch=0,
            grid=(N * H, Co // tn, 3 * kt),
            in_specs=[
                _block_spec((1, W + 2, tk), x_map, buffered=True),
                _block_spec((1, 3, tk, tn), w_map, buffered=True),
                pl.BlockSpec((1, tn), lambda m, j, r: (0, j)),
                pl.BlockSpec((1, tn), lambda m, j, r: (0, j)),
            ],
            out_specs=pl.BlockSpec((1, W, tn), lambda m, j, r: (m, 0, j)),
            scratch_shapes=[pltpu.VMEM((W, tn), jnp.float32)],
        ),
        compiler_params=pltpu.CompilerParams(
            dimension_semantics=("parallel", "parallel", "arbitrary"),
            vmem_limit_bytes=_VMEM_LIMIT),
    )(xp, w.astype(jnp.bfloat16),
      scale.reshape(1, Co).astype(jnp.float32),
      bias.reshape(1, Co).astype(jnp.float32))
    return out.reshape(N, H, W, Co)


# ----------------------------------------------------------------------------
# Separable spatial operators (adaptive avg-pool / bilinear resize)
# ----------------------------------------------------------------------------

def adaptive_avg_pool_matrix(in_size, out_size):
    """nn.AdaptiveAvgPool2d bin semantics: [floor(i*in/out), ceil((i+1)*in/out))."""
    m = np.zeros((out_size, in_size), np.float32)
    for o in range(out_size):
        start = (o * in_size) // out_size
        end = -(-((o + 1) * in_size) // out_size)  # ceil div
        m[o, start:end] = 1.0 / (end - start)
    return m


def bilinear_matrix_align_corners(in_size, out_size):
    """F.interpolate(mode='bilinear', align_corners=True), per axis."""
    m = np.zeros((out_size, in_size), np.float32)
    if in_size == 1:
        m[:, 0] = 1.0
        return m
    if out_size == 1:
        m[0, 0] = 1.0
        return m
    scale = (in_size - 1) / (out_size - 1)
    for o in range(out_size):
        src = o * scale
        y0 = min(int(np.floor(src)), in_size - 1)
        y1 = min(y0 + 1, in_size - 1)
        w1 = src - y0
        m[o, y0] += 1.0 - w1
        m[o, y1] += w1
    return m


def spatial_transform(x_nhwc, mh_np, mw_np, *, out_dtype=jnp.bfloat16):
    """Separable pool / bilinear-resize (== kron(mh, mw)): one H-pass matmul then
    one W-pass matmul; batch + channels ride the lane dimension and the H-pass
    result goes straight to W-major layout (one transpose saved per call)."""
    N, H, W, C = x_nhwc.shape
    mh = jnp.asarray(np.asarray(mh_np, np.float32))
    mw = jnp.asarray(np.asarray(mw_np, np.float32))
    Ho, Wo = int(mh.shape[0]), int(mw.shape[0])

    xt = jnp.transpose(x_nhwc, (1, 0, 2, 3)).reshape(H, N * W * C)
    y = pallas_matmul(mh, xt, out_dtype=jnp.bfloat16)                  # (Ho, N*W*C)
    y = jnp.transpose(y.reshape(Ho, N, W, C), (2, 1, 0, 3)).reshape(W, N * Ho * C)
    z = pallas_matmul(mw, y, out_dtype=out_dtype)                      # (Wo, N*Ho*C)
    return jnp.transpose(z.reshape(Wo, N, Ho, C), (1, 2, 0, 3))        # (N, Ho, Wo, C)


# ----------------------------------------------------------------------------
# Parameters (deterministic synthetic init, shapes from the module __init__)
# ----------------------------------------------------------------------------

FEATURE_DIMS = 2048  # hard-coded in PSPNet.__init__


def _bn_fold(key, c):
    """Inference-mode BatchNorm2d: scale = g/sqrt(var+eps), bias = b - mean*scale."""
    g = jax.random.uniform(key, (c,), jnp.float32, 0.5, 1.5)
    b = jax.random.normal(jax.random.fold_in(key, 1), (c,)) * 0.1
    mean = jax.random.normal(jax.random.fold_in(key, 2), (c,)) * 0.1
    var = jax.random.uniform(jax.random.fold_in(key, 3), (c,), jnp.float32, 0.5, 1.5)
    scale = g / jnp.sqrt(var + 1e-5)
    bias = b - mean * scale
    return scale.astype(jnp.float32), bias.astype(jnp.float32)


def init_params(key, in_channels, num_classes, sizes=(1, 2, 3, 6)):
    inner_dims = FEATURE_DIMS // len(sizes)  # 512
    ks = jax.random.split(key, 16)
    p = {'sizes': list(sizes), 'num_classes': num_classes}

    # backbone stub: 1x1 conv in_channels -> feature_dims (+ BN)
    p['bb_w'] = (jax.random.normal(ks[0], (in_channels, FEATURE_DIMS)) /
                 np.sqrt(in_channels)).astype(jnp.float32)
    p['bb_scale'], p['bb_bias'] = _bn_fold(ks[1], FEATURE_DIMS)

    # PSPModule branches: conv1x1(2048 -> 512, no bias) + BN per size
    p['psp_w'], p['psp_scale'], p['psp_bias'] = [], [], []
    for i in range(len(sizes)):
        w = (jax.random.normal(ks[2 + i], (FEATURE_DIMS, inner_dims)) /
             np.sqrt(FEATURE_DIMS)).astype(jnp.float32)
        s, b = _bn_fold(ks[6 + i], inner_dims)
        p['psp_w'].append(w)
        p['psp_scale'].append(s)
        p['psp_bias'].append(b)

    # classifier: conv3x3(4096 -> 512, no bias) + BN + ReLU, conv1x1(512 -> classes)
    p['cls1_w'] = (jax.random.normal(ks[10], (3, 3, FEATURE_DIMS * 2, inner_dims)) /
                   np.sqrt(9 * FEATURE_DIMS * 2)).astype(jnp.float32)   # (dy,dx,Cin,Co)
    p['cls1_scale'], p['cls1_bias'] = _bn_fold(ks[11], inner_dims)

    # pad class dim to a lane-dense multiple of 128 (used only inside the cls2 matmul)
    ncp = _round_up(max(num_classes, 1), 128)
    w2 = (jax.random.normal(ks[12], (inner_dims, num_classes)) /
          np.sqrt(inner_dims))
    p['cls2_w'] = jnp.pad(w2, ((0, 0), (0, ncp - num_classes))).astype(jnp.float32)
    return p


# ----------------------------------------------------------------------------
# Forward pass
# ----------------------------------------------------------------------------

def pspnet_forward(x_nchw, params):
    N, Cin, H, W = x_nchw.shape
    x = jnp.transpose(x_nchw, (0, 2, 3, 1))  # -> NHWC
    H8, W8 = H // 8, W // 8

    # ---- backbone stub (see TODO at top): /8 avg-pool + 1x1 conv + BN + ReLU ----
    feat = spatial_transform(x, adaptive_avg_pool_matrix(H, H8),
                             adaptive_avg_pool_matrix(W, W8))              # (N,H8,W8,Cin)
    f = pallas_matmul(feat.reshape(N * H8 * W8, Cin), params['bb_w'],
                      params['bb_scale'], params['bb_bias'],
                      apply_relu=True, out_dtype=jnp.bfloat16)
    feat = f.reshape(N, H8, W8, FEATURE_DIMS)                              # (N,H8,W8,2048) bf16

    # ---- PSPModule: [identity] + 4x (adaptive pool -> 1x1 conv+BN+ReLU -> upsample) ----
    outs = [feat]
    for i, s in enumerate(params['sizes']):
        if s == 1:
            # global pool is a mean; the align_corners upsample of a 1x1 map is a broadcast
            pooled = jnp.mean(feat.astype(jnp.float32), axis=(1, 2))       # (N, 2048)
            y = pallas_matmul(pooled, params['psp_w'][i], params['psp_scale'][i],
                              params['psp_bias'][i], apply_relu=True,
                              out_dtype=jnp.bfloat16)                      # (N, 512)
            outs.append(jnp.broadcast_to(y[:, None, None, :],
                                         (N, H8, W8, y.shape[-1])))
        else:
            pooled = spatial_transform(feat, adaptive_avg_pool_matrix(H8, s),
                                       adaptive_avg_pool_matrix(W8, s))    # (N,s,s,2048)
            y = pallas_matmul(pooled.reshape(N * s * s, FEATURE_DIMS),
                              params['psp_w'][i], params['psp_scale'][i],
                              params['psp_bias'][i], apply_relu=True,
                              out_dtype=jnp.bfloat16)
            y = y.reshape(N, s, s, -1)
            outs.append(spatial_transform(y, bilinear_matrix_align_corners(s, H8),
                                          bilinear_matrix_align_corners(s, W8)))
    psp = jnp.concatenate(outs, axis=-1)                                   # (N,H8,W8,4096) bf16

    # ---- classifier: fused 3x3 conv + BN + ReLU (no im2col), then 1x1 conv ----
    y = pallas_conv3x3_bn_relu(psp, params['cls1_w'], params['cls1_scale'],
                               params['cls1_bias'], out_dtype=jnp.bfloat16)
    y2 = pallas_matmul(y.reshape(N * H8 * W8, -1), params['cls2_w'],
                       out_dtype=jnp.bfloat16)                             # (M, 128) lane-padded

    # drop the class-lane padding BEFORE the full-resolution upsample (keep 8 lanes)
    nc = params['num_classes']
    nc8 = _round_up(nc, 8)
    logits = y2[:, :nc8].reshape(N, H8, W8, nc8)

    # ---- final bilinear upsample (align_corners=True) back to input size ----
    out = spatial_transform(logits, bilinear_matrix_align_corners(H8, H),
                            bilinear_matrix_align_corners(W8, W),
                            out_dtype=jnp.float32)                         # (N,H,W,nc8)
    out = out[..., :nc]
    return jnp.transpose(out, (0, 3, 1, 2))                                # -> NCHW


# ----------------------------------------------------------------------------

if __name__ == "__main__":
    key = jax.random.PRNGKey(0)
    kx, kp = jax.random.split(key)

    N, Cin, H, W = 2, 3, 32, 32
    num_classes = 5

    x = jax.random.normal(kx, (N, Cin, H, W), jnp.float32)
    params = init_params(kp, Cin, num_classes)

    out = pspnet_forward(x, params)
    out = jax.block_until_ready(out)

    assert out.shape == (N, num_classes, H, W), out.shape
    assert bool(jnp.all(jnp.isfinite(out)))
    print("KERNEL_OK")
</pallas_src>

<mosaic_0001>
module attributes {stable_mosaic.version = 11 : i64} {
  func.func @kernel(%arg0: i32, %arg1: i32, %arg2: i32, %arg3: memref<4x32xbf16, #tpu.memory_space<vmem>>, %arg4: memref<32x192xbf16, #tpu.memory_space<vmem>>, %arg5: memref<4x192xbf16, #tpu.memory_space<vmem>>, %arg6: memref<4x192xf32, #tpu.memory_space<vmem>>) attributes {dimension_semantics = [#tpu.dimension_semantics<parallel>, #tpu.dimension_semantics<parallel>, #tpu.dimension_semantics<arbitrary>], iteration_bounds = array<i64: 1, 1, 1>, scalar_prefetch = 0 : i64, scratch_operands = 1 : i64, tpu.core_type = #tpu.core_type<tc>, window_params = [{transform_indices = @transform_0, window_bounds = array<i64: 4, 32>}, {transform_indices = @transform_1, window_bounds = array<i64: 32, 192>}, {transform_indices = @transform_2, window_bounds = array<i64: 4, 192>}]} {
    %c0_i32 = arith.constant 0 : i32
    %0 = arith.cmpi eq, %arg2, %c0_i32 : i32
    %1 = arith.extui %0 : i1 to i32
    %c0_i32_0 = arith.constant 0 : i32
    %2 = arith.cmpi ne, %1, %c0_i32_0 : i32
    scf.if %2 {
      %cst_10 = arith.constant 0.000000e+00 : f32
      %12 = vector.broadcast %cst_10 : f32 to vector<4x192xf32>
      %c0_11 = arith.constant 0 : index
      %c0_12 = arith.constant 0 : index
      %13 = vector.load %arg6[%c0_11, %c0_12] : memref<4x192xf32, #tpu.memory_space<vmem>>, vector<4x192xf32>
      tpu.vector_store %arg6[%c0_11, %c0_12], %12 {strides = array<i32>} : memref<4x192xf32, #tpu.memory_space<vmem>>, vector<4x192xf32>,
    } else {
    }
    %c0 = arith.constant 0 : index
    %c0_1 = arith.constant 0 : index
    %3 = vector.load %arg6[%c0, %c0_1] : memref<4x192xf32, #tpu.memory_space<vmem>>, vector<4x192xf32>
    %c0_2 = arith.constant 0 : index
    %c0_3 = arith.constant 0 : index
    %4 = vector.load %arg3[%c0_2, %c0_3] : memref<4x32xbf16, #tpu.memory_space<vmem>>, vector<4x32xbf16>
    %c0_4 = arith.constant 0 : index
    %c0_5 = arith.constant 0 : index
    %5 = vector.load %arg4[%c0_4, %c0_5] : memref<32x192xbf16, #tpu.memory_space<vmem>>, vector<32x192xbf16>
    %cst = arith.constant dense<0.000000e+00> : vector<4x192xf32>
    %6 = tpu.matmul %4, %5, %cst {dimension_numbers = #tpu.dot_dimension_numbers<[1], [0], [0], [1], [0, 0, 1, 1], [], []>} : vector<4x32xbf16>, vector<32x192xbf16>, vector<4x192xf32> -> vector<4x192xf32>
    %7 = arith.addf %3, %6 : vector<4x192xf32>
    %c0_6 = arith.constant 0 : index
    %c0_7 = arith.constant 0 : index
    %8 = vector.load %arg6[%c0_6, %c0_7] : memref<4x192xf32, #tpu.memory_space<vmem>>, vector<4x192xf32>
    tpu.vector_store %arg6[%c0_6, %c0_7], %7 {strides = array<i32>} : memref<4x192xf32, #tpu.memory_space<vmem>>, vector<4x192xf32>,
    %c0_i32_8 = arith.constant 0 : i32
    %9 = arith.cmpi eq, %arg2, %c0_i32_8 : i32
    %10 = arith.extui %9 : i1 to i32
    %c0_i32_9 = arith.constant 0 : i32
    %11 = arith.cmpi ne, %10, %c0_i32_9 : i32
    scf.if %11 {
      %c0_10 = arith.constant 0 : index
      %c0_11 = arith.constant 0 : index
      %12 = vector.load %arg6[%c0_10, %c0_11] : memref<4x192xf32, #tpu.memory_space<vmem>>, vector<4x192xf32>
      %13 = arith.truncf %12 : vector<4x192xf32> to vector<4x192xbf16>
      %c0_12 = arith.constant 0 : index
      %c0_13 = arith.constant 0 : index
      %14 = vector.load %arg5[%c0_12, %c0_13] : memref<4x192xbf16, #tpu.memory_space<vmem>>, vector<4x192xbf16>
      tpu.vector_store %arg5[%c0_12, %c0_13], %13 {strides = array<i32>} : memref<4x192xbf16, #tpu.memory_space<vmem>>, vector<4x192xbf16>,
    } else {
    }
    return
  }
  func.func @transform_0(%arg0: i32, %arg1: i32, %arg2: i32) -> (i32, i32) {
    %c0_i32 = arith.constant 0 : i32
    return %arg0, %arg2 : i32, i32
  }
  func.func @transform_1(%arg0: i32, %arg1: i32, %arg2: i32) -> (i32, i32) {
    %c0_i32 = arith.constant 0 : i32
    return %arg2, %arg1 : i32, i32
  }
  func.func @transform_2(%arg0: i32, %arg1: i32, %arg2: i32) -> (i32, i32) {
    %c0_i32 = arith.constant 0 : i32
    return %arg0, %arg1 : i32, i32
  }
}

</mosaic_0001>

<llo_original>
// kernel: tpu_custom_call.1
$region0: #{tpu_custom_call.1}
  #allocation0 [shape = 'u32[]', space=smem, size = 0x4, offset = 0x4, fixed_abs, tag = 'smem constant byte address 0x4 - core index']
  #allocation1 [shape = 'u32[144,128]{1,0:T(1,128)}', space=vmem, size = 0x12000, scoped, tag = 'internal scratch']
  #allocation2 [shape = 'f32[4,192]{1,0:T(4,128)}', space=vmem, size = 0x1000, scoped, tag = 'scratch operand']
  %s0 = inlined_call_operand.hbm [shape: bf16[4,32], index: 0, kind: input, shape index: {}]
  %s1 = inlined_call_operand.hbm [shape: bf16[32,192], index: 1, kind: input, shape index: {}]
  %s2 = inlined_call_operand.hbm [shape: bf16[4,192], index: 2, kind: output, shape index: {}]
  %s3 = sld [smem:[#allocation0]]
  $region34: #{tpu_custom_call.1} parent=0
    _
  %s5 = ssub.s32 1, %s3
  %s6 = scalar_select 0, %s5, %s3
  $region1: #{tpu_custom_call.1} parent=0
    #allocation3 [shape = 'u8[1024]{0}', space=vmem, size = 0x400, scoped, tag = 'input window, operand 0, single buffered']
    #allocation4 [shape = 's32[1]{0}', space=sflag, size = 0x4, scoped, tag = 'scoped memory for tpu_custom_call.1']
    #allocation5 [shape = 's32[1]{0}', space=sflag, size = 0x4, scoped, tag = 'scoped memory for tpu_custom_call.1']
    #allocation6 [shape = 'u8[16384]{0}', space=vmem, size = 0x4000, scoped, tag = 'input window, operand 1, single buffered']
    #allocation7 [shape = 's32[1]{0}', space=sflag, size = 0x4, scoped, tag = 'scoped memory for tpu_custom_call.1']
    #allocation8 [shape = 'u8[2048]{0}', space=vmem, size = 0x800, scoped, tag = 'output window, operand 0, single buffered']
    %7 = vsyncpa [#allocation4], 0
    %8 = vsyncpa [#allocation7], 0
    %9 = vsyncpa [#allocation5], 0
    // Predicated region
    $region2: #{tpu_custom_call.1} parent=1 // pred_check
      _
    $region3: #{tpu_custom_call.1} parent=1 // pred_check_branch
      %11 = sbr.rel (0) target = $region5
    $region4: #{tpu_custom_call.1} parent=1 // pred_region
      %s13 = ssub.s32 32, 32
      %14 = vsyncadd [#allocation4], %s13
      %s16 = sshll.u32 [#allocation3], 4
      %s17 = int_to_ptr.vmem [resolvable:$true] %s16
      %19 = dma.hbm_to_vmem [thread:$0]  %s0, 32, %s17, [#allocation4]
    $region5: #{tpu_custom_call.1} parent=1 // pred_fallthru
      _
    // Predicated region
    $region6: #{tpu_custom_call.1} parent=1 // pred_check
      _
    $region7: #{tpu_custom_call.1} parent=1 // pred_check_branch
      %21 = sbr.rel (0) target = $region9
    $region8: #{tpu_custom_call.1} parent=1 // pred_region
      %s23 = ssub.s32 512, 512
      %24 = vsyncadd [#allocation7], %s23
      %s25 = sshll.u32 [#allocation6], 4
      %s26 = int_to_ptr.vmem [resolvable:$true] %s25
      %31 = dma.hbm_to_vmem [thread:$0]  %s1, 512, %s26, [#allocation7], 128, 128, 8
    $region9: #{tpu_custom_call.1} parent=1 // pred_fallthru
      _
    // Predicated region
    $region10: #{tpu_custom_call.1} parent=1 // pred_check
      _
    $region11: #{tpu_custom_call.1} parent=1 // pred_check_branch
      %33 = sbr.rel (0) target = $region13
    $region12: #{tpu_custom_call.1} parent=1 // pred_region
      %34 = dma.done [#allocation4], 32
    $region13: #{tpu_custom_call.1} parent=1 // pred_fallthru
      _
    // Predicated region
    $region14: #{tpu_custom_call.1} parent=1 // pred_check
      _
    $region15: #{tpu_custom_call.1} parent=1 // pred_check_branch
      %36 = sbr.rel (0) target = $region17
    $region16: #{tpu_custom_call.1} parent=1 // pred_region
      %37 = dma.done [#allocation7], 512
    $region17: #{tpu_custom_call.1} parent=1 // pred_fallthru
      _
    %p39 = scmp.eq.s32.totalorder 0, 0
    // Predicated region
    $region18: #{tpu_custom_call.1} parent=1 // pred_check
      %p40 = pneg %p39
    $region19: #{tpu_custom_call.1} parent=1 // pred_check_branch
      %42 = sbr.rel (%p40) target = $region21
    $region20: #{tpu_custom_call.1} parent=1 // pred_region
      %vm43 = vcmask 1043456
      %vm44 = vcmask 523268
      %vm45 = vmor %vm44, %vm43
      %46 = vst.msk [vmem:[#allocation2] sm:$0xff] %vm45, 0.0
    $region21: #{tpu_custom_call.1} parent=1 // pred_fallthru
      _
    %v47 = vld [vmem:[#allocation2] sm:$0xff]
    %v48 = vld [vmem:[#allocation3] sm:$0x3]
    %v49 = vld [vmem:[#allocation6] sm:$0xff]
    %v50 = vld [vmem:[#allocation6 + $0x8] sm:$0xff]
    %v51 = vld [vmem:[#allocation6 + $0x10] sm:$0xff]
    %v52 = vld [vmem:[#allocation6 + $0x18] sm:$0xff]
    %v57 = vunpack.c.l.b16 %v49
    %v58 = vunpack.c.h.b16 %v49
    %v59 = vunpack.c.l.b16 %v50
    %v60 = vunpack.c.h.b16 %v50
    %v61 = vunpack.c.l.b16 %v51
    %v62 = vunpack.c.h.b16 %v51
    %v63 = vunpack.c.l.b16 %v52
    %v64 = vunpack.c.h.b16 %v52
    %v65 = vpack.c.b16 %v59, %v57
    %v66 = vpack.c.b16 %v60, %v58
    %v67 = vpack.c.b16 %v63, %v61
    %v68 = vpack.c.b16 %v64, %v62
    %vm73 = vcmask 261120
    %v75 = vsel %vm73, %v48, 0
    %77 = vmatprep.subr.bf16.mxu0 0
    %78 = vmatpush1.bf16.msra.mxu0 0
    %79 = vmatprep.subr.bf16.mxu0 0
    %80 = vmatpush1.bf16.msra.mxu0 0
    %81 = vmatprep.subr.bf16.mxu0 0
    %82 = vmatpush1.bf16.msra.mxu0 0
    %83 = vmatprep.subr.bf16.mxu0 0
    %84 = vmatpush1.bf16.msra.mxu0 0
    %85 = vmatprep.subr.bf16.mxu0 0
    %86 = vmatpush1.bf16.msra.mxu0 0
    %87 = vmatprep.subr.bf16.mxu0 0
    %88 = vmatpush1.bf16.msra.mxu0 0
    %89 = vmatprep.subr.bf16.mxu0 %v68
    %90 = vmatpush1.bf16.msra.mxu0 %v67
    %91 = vmatprep.subr.bf16.mxu0 %v66
    %92 = vmatpush1.bf16.msra.mxu0 %v65
    %93 = vmatprep.subr.bf16.mxu0 0
    %94 = vmatpush2.bf16.msra.mxu0 0
    %95 = vmatprep.subr.bf16.mxu0 0
    %96 = vmatpush2.bf16.msra.mxu0 0
    %97 = vmatprep.subr.bf16.mxu0 0
    %98 = vmatpush2.bf16.msra.mxu0 0
    %99 = vmatprep.subr.bf16.mxu0 0
    %100 = vmatpush2.bf16.msra.mxu0 0
    %101 = vmatprep.subr.bf16.mxu0 0
    %102 = vmatpush2.bf16.msra.mxu0 0
    %103 = vmatprep.subr.bf16.mxu0 0
    %104 = vmatpush2.bf16.msra.mxu0 0
    %105 = vmatprep.subr.bf16.mxu0 0
    %106 = vmatpush2.bf16.msra.mxu0 0
    %107 = vmatprep.subr.bf16.mxu0 0
    %108 = vmatpush2.bf16.msra.mxu0 0
    %109 = vmatprep.mubr.bf16.mxu0 0
    %110 = vmatmul.mubr.bf16.gmra.mxu0 %v75
    %v111 = vpop.f32.mrf.mxu0
    %v112 = vadd.f32 0.0, %v111
    %v113 = vpop.f32.mrf.mxu0
    %v114 = vadd.f32 0.0, %v113
    %v115 = vpop.f32.mrf.mxu0
    %v116 = vpop.f32.mrf.mxu0
    %117 = vdwg.mxu0
    %v120 = vcombine.low %v112, %v114
    %v122 = vadd.f32 %v47, %v120
    %vm123 = vcmask 1043456
    %vm124 = vcmask 523268
    %vm125 = vmor %vm124, %vm123
    %126 = vst.msk [vmem:[#allocation2] sm:$0xff] %vm125, %v122
    // Predicated region
    $region22: #{tpu_custom_call.1} parent=1 // pred_check
      %p127 = pneg %p39
    $region23: #{tpu_custom_call.1} parent=1 // pred_check_branch
      %129 = sbr.rel (%p127) target = $region25
    $region24: #{tpu_custom_call.1} parent=1 // pred_region
      %v130 = vld [vmem:[#allocation2] sm:$0xff]
      %v132 = vcombine.high %v130, %v130
      %v134 = vpack.c.bf16 %v130, %v130
      %v135 = vpack.c.bf16 %v132, %v132
      %v138 = vcombine.low %v134, %v135
      %v140 = vunpack.c.l.s4 1983009808
      %v141 = vunpack.c.0.s8 %v140
      %v142 = vlaneseq
      %v143 = vshrl.u32 %v142, 7
      %v144 = vsub.s32 %v141, %v143
      %v145 = vrot.slane %v138, %v144
      %vm147 = vcmask 1041408
      %vm148 = vcmask 519170
      %vm149 = vmor %vm148, %vm147
      %150 = vst.msk [vmem:[#allocation8] sm:$0xf] %vm149, %v145
    $region25: #{tpu_custom_call.1} parent=1 // pred_fallthru
      _
    // Predicated region
    $region26: #{tpu_custom_call.1} parent=1 // pred_check
      _
    $region27: #{tpu_custom_call.1} parent=1 // pred_check_branch
      %152 = sbr.rel (0) target = $region29
    $region28: #{tpu_custom_call.1} parent=1 // pred_region
      %s154 = ssub.s32 64, 64
      %155 = vsyncadd [#allocation5], %s154
      %s157 = sshll.u32 [#allocation8], 4
      %s158 = int_to_ptr.vmem [resolvable:$true] %s157
      %160 = dma.vmem_to_hbm [thread:$0]  %s158, 64, %s2, [#allocation5]
    $region29: #{tpu_custom_call.1} parent=1 // pred_fallthru
      _
    // Predicated region
    $region30: #{tpu_custom_call.1} parent=1 // pred_check
      _
    $region31: #{tpu_custom_call.1} parent=1 // pred_check_branch
      %162 = sbr.rel (0) target = $region33
    $region32: #{tpu_custom_call.1} parent=1 // pred_region
      %163 = dma.done [#allocation5], 64
    $region33: #{tpu_custom_call.1} parent=1 // pred_fallthru
      _
    %164 = vsyncpa [#allocation4], 1
    %165 = vsyncpa [#allocation7], 1
    %166 = vsyncpa [#allocation5], 1

</llo_original>
